<compile_context>
chip_gen: v7x
topology: tpu7x:2x2x1
jax: 0.10.0
libtpu: 0.0.40
codegen_flags: <defaults>
</compile_context>

<pallas_src>
import functools

import jax
import jax.numpy as jnp
from jax.experimental import pallas as pl
from jax.experimental.pallas import tpu as pltpu


_VMEM_LIMIT = 48 * 1024 * 1024  # safe on v5e/v6e (128 MiB phys) and v7x (64 MiB phys)


def _round_up(x, m):
    return ((x + m - 1) // m) * m


# ---------------------------------------------------------------------------
# Kernel 1: y = (relu?)(x @ W + b), tiled over rows.
# ---------------------------------------------------------------------------
def _linear_kernel(x_ref, w_ref, b_ref, o_ref, *, relu):
    # bf16 MXU inputs, f32 accumulate; bias add & relu in f32.
    y = jnp.dot(x_ref[...].astype(jnp.bfloat16), w_ref[...],
                preferred_element_type=jnp.float32)
    y = y + b_ref[...]
    if relu:
        y = jnp.maximum(y, 0.0)
    o_ref[...] = y.astype(o_ref.dtype)


def pallas_linear(x, w, b, *, relu, tile_m=256):
    """x:(M,K) f32, w:(K,N) f32, b:(1,N) f32 -> (M,N) f32."""
    M, K = x.shape
    K2, N = w.shape
    assert K == K2 and b.shape == (1, N)

    # Lane-dense output: pad N to a multiple of 128 so stores are unmasked vst.
    N_pad = _round_up(N, 128)
    if N_pad != N:
        w = jnp.pad(w, ((0, 0), (0, N_pad - N)))
        b = jnp.pad(b, ((0, 0), (0, N_pad - N)))
    w = w.astype(jnp.bfloat16)  # halve weight DMA bytes / VMEM footprint

    # Tile over M: parallel grid axis -> software pipelining + megacore sharding.
    tm = min(tile_m, _round_up(M, 8))
    M_pad = _round_up(M, tm)
    if M_pad != M:
        x = jnp.pad(x, ((0, M_pad - M), (0, 0)))
    grid = (M_pad // tm,)

    out = pl.pallas_call(
        functools.partial(_linear_kernel, relu=relu),
        out_shape=jax.ShapeDtypeStruct((M_pad, N_pad), jnp.float32),
        grid=grid,
        in_specs=[
            pl.BlockSpec((tm, K), lambda i: (i, 0)),
            pl.BlockSpec((K, N_pad), lambda i: (0, 0)),   # resident weights
            pl.BlockSpec((1, N_pad), lambda i: (0, 0)),
        ],
        out_specs=pl.BlockSpec((tm, N_pad), lambda i: (i, 0)),
        compiler_params=pltpu.CompilerParams(
            dimension_semantics=("parallel",),
            vmem_limit_bytes=_VMEM_LIMIT,
        ),
    )(x, w, b)
    return out[:M, :N]


# ---------------------------------------------------------------------------
# Kernel 2: one TransformerEncoderLayer (PyTorch default: post-LN, ReLU FFN),
# one batch element per (parallel) grid step. Head-batched attention.
# Weights arrive pre-reshaped per head:
#   wq/wk/wv : (nhead, D, hd) bf16   bq/bk/bv : (nhead, 1, hd) f32
#   wo       : (nhead, hd, D) bf16   bo       : (1, D) f32
#   w1 : (D, d_hid) bf16, w2 : (d_hid, D) bf16, biases/LN params f32.
# 1/sqrt(hd) is already folded into wq/bq.
# ---------------------------------------------------------------------------
def _encoder_layer_kernel(
    x_ref, mb_ref,
    wq_ref, bq_ref, wk_ref, bk_ref, wv_ref, bv_ref, wo_ref, bo_ref,
    g1_ref, beta1_ref, w1_ref, b1_ref, w2_ref, b2_ref, g2_ref, beta2_ref,
    o_ref, *, nhead):
    x = x_ref[0]            # (S, D) f32
    mb = mb_ref[0]          # (1, S) additive key-padding bias (0 or -1e9)
    S, D = x.shape

    x_bf = x.astype(jnp.bfloat16)
    xb = jnp.broadcast_to(x_bf, (nhead, S, D))          # head-batched view of x

    # QKV projections, batched over heads (leading batch dim -> clean MXU lowering).
    q = jnp.einsum('hsd,hde->hse', xb, wq_ref[...],
                   preferred_element_type=jnp.float32) + bq_ref[...]
    k = jnp.einsum('hsd,hde->hse', xb, wk_ref[...],
                   preferred_element_type=jnp.float32) + bk_ref[...]
    v = jnp.einsum('hsd,hde->hse', xb, wv_ref[...],
                   preferred_element_type=jnp.float32) + bv_ref[...]

    # scores: (nhead, S, S); scale already folded into wq/bq.
    s = jnp.einsum('hqe,hke->hqk', q.astype(jnp.bfloat16), k.astype(jnp.bfloat16),
                   preferred_element_type=jnp.float32)
    s = s + mb                                           # mask keys (broadcast h, q)
    s = s - jnp.max(s, axis=-1, keepdims=True)
    p = jnp.exp(s)
    p = p * pl.reciprocal(jnp.sum(p, axis=-1, keepdims=True), approx=True)

    # context: (nhead, S, hd)
    ctx = jnp.einsum('hqk,hke->hqe', p.astype(jnp.bfloat16), v.astype(jnp.bfloat16),
                     preferred_element_type=jnp.float32)

    # output projection: sum_h ctx[h] @ wo[h]  == concat(ctx) @ Wo   (no lane concat)
    attn = jnp.sum(
        jnp.einsum('hse,hed->hsd', ctx.astype(jnp.bfloat16), wo_ref[...],
                   preferred_element_type=jnp.float32),
        axis=0) + bo_ref[...]                            # (S, D)

    # residual + LayerNorm 1 (f32)
    h1 = x + attn
    mu = jnp.mean(h1, axis=-1, keepdims=True)
    var = jnp.mean((h1 - mu) ** 2, axis=-1, keepdims=True)
    h1 = (h1 - mu) * jax.lax.rsqrt(var + 1e-5) * g1_ref[...] + beta1_ref[...]

    # FFN: linear -> ReLU -> linear (bf16 matmuls, f32 accumulate)
    f = jnp.dot(h1.astype(jnp.bfloat16), w1_ref[...],
                preferred_element_type=jnp.float32) + b1_ref[...]
    f = jnp.maximum(f, 0.0)
    f = jnp.dot(f.astype(jnp.bfloat16), w2_ref[...],
                preferred_element_type=jnp.float32) + b2_ref[...]

    # residual + LayerNorm 2 (f32)
    h2 = h1 + f
    mu2 = jnp.mean(h2, axis=-1, keepdims=True)
    var2 = jnp.mean((h2 - mu2) ** 2, axis=-1, keepdims=True)
    out = (h2 - mu2) * jax.lax.rsqrt(var2 + 1e-5) * g2_ref[...] + beta2_ref[...]

    o_ref[0] = out.astype(o_ref.dtype)


def _prep_layer(lp, nhead):
    """Reshape/cast canonical f32 layer params into the kernel layout (one-time)."""
    D = lp["wq"].shape[0]
    hd = D // nhead
    scale = 1.0 / (float(hd) ** 0.5)

    def heads_in(w):   # (D, D) -> (nhead, D, hd): columns of head h
        return w.reshape(D, nhead, hd).transpose(1, 0, 2)

    def heads_b(b):    # (1, D) -> (nhead, 1, hd)
        return b.reshape(nhead, hd)[:, None, :]

    return dict(
        wq=(heads_in(lp["wq"]) * scale).astype(jnp.bfloat16),
        bq=heads_b(lp["bq"]) * scale,
        wk=heads_in(lp["wk"]).astype(jnp.bfloat16), bk=heads_b(lp["bk"]),
        wv=heads_in(lp["wv"]).astype(jnp.bfloat16), bv=heads_b(lp["bv"]),
        wo=lp["wo"].reshape(nhead, hd, D).astype(jnp.bfloat16), bo=lp["bo"],
        g1=lp["g1"], beta1=lp["beta1"],
        w1=lp["w1"].astype(jnp.bfloat16), b1=lp["b1"],
        w2=lp["w2"].astype(jnp.bfloat16), b2=lp["b2"],
        g2=lp["g2"], beta2=lp["beta2"],
    )


def pallas_encoder_layer(x, mask_bias, kp, *, nhead):
    B, S, D = x.shape
    hd = D // nhead
    d_hid = kp["w1"].shape[1]

    def wspec(shape):
        return pl.BlockSpec(shape, lambda b: tuple(0 for _ in shape))

    in_specs = [
        pl.BlockSpec((1, S, D), lambda b: (b, 0, 0)),        # x
        pl.BlockSpec((1, 1, S), lambda b: (b, 0, 0)),        # mask bias
        wspec((nhead, D, hd)), wspec((nhead, 1, hd)),        # wq, bq
        wspec((nhead, D, hd)), wspec((nhead, 1, hd)),        # wk, bk
        wspec((nhead, D, hd)), wspec((nhead, 1, hd)),        # wv, bv
        wspec((nhead, hd, D)), wspec((1, D)),                # wo, bo
        wspec((1, D)), wspec((1, D)),                        # ln1 gamma, beta
        wspec((D, d_hid)), wspec((1, d_hid)),                # w1, b1
        wspec((d_hid, D)), wspec((1, D)),                    # w2, b2
        wspec((1, D)), wspec((1, D)),                        # ln2 gamma, beta
    ]
    return pl.pallas_call(
        functools.partial(_encoder_layer_kernel, nhead=nhead),
        out_shape=jax.ShapeDtypeStruct((B, S, D), x.dtype),
        grid=(B,),
        in_specs=in_specs,
        out_specs=pl.BlockSpec((1, S, D), lambda b: (b, 0, 0)),
        compiler_params=pltpu.CompilerParams(
            dimension_semantics=("parallel",),
            vmem_limit_bytes=_VMEM_LIMIT,
        ),
    )(
        x, mask_bias,
        kp["wq"], kp["bq"], kp["wk"], kp["bk"], kp["wv"], kp["bv"],
        kp["wo"], kp["bo"], kp["g1"], kp["beta1"],
        kp["w1"], kp["b1"], kp["w2"], kp["b2"], kp["g2"], kp["beta2"],
    )


# ---------------------------------------------------------------------------
# Full Fin2Vec forward
# ---------------------------------------------------------------------------
def fin2vec_forward(src, idx, msk, params, *, nhead):
    B, S, E = src.shape
    d_model = params["l0_w"].shape[1]
    outputs = params["l1_w"].shape[1]

    # embedding gather (glue, plain JAX) + add, matching src += word2embedding(idx)
    emb = jnp.take(params["emb_table"], idx.astype(jnp.int32), axis=0)  # (B, S, E)
    x = src + emb

    # tfLinear0: Linear(E, d_model) + ReLU
    x = pallas_linear(x.reshape(B * S, E), params["l0_w"], params["l0_b"], relu=True)
    x = x.reshape(B, S, d_model)

    # key-padding mask -> additive bias (0 where valid, large negative where padded)
    mask_bias = jnp.where(msk, 0.0, -1e9).astype(jnp.float32).reshape(B, 1, S)

    # TransformerEncoder: stack of encoder layers (head-split / bf16 prep in wrapper)
    for lp in params["layers"]:
        kp = _prep_layer(lp, nhead)
        x = pallas_encoder_layer(x, mask_bias, kp, nhead=nhead)

    # tfLinear1: Linear(d_model, outputs) + ReLU (lane-dense padded to 128 inside)
    out = pallas_linear(x.reshape(B * S, d_model), params["l1_w"], params["l1_b"], relu=True)
    return out.reshape(B, S, outputs)


# ---------------------------------------------------------------------------
# Deterministic parameter initialization (synthetic; module __init__ shapes)
# ---------------------------------------------------------------------------
def init_params(key, *, ncodes, emb_dims, d_model, nhead, d_hid, nlayers, outputs):
    E = emb_dims[0] * emb_dims[1]
    n_embed_rows = ncodes + 1  # module adds one row for the masked code

    def nrm(k, shape, scale=0.02):
        return scale * jax.random.normal(k, shape, jnp.float32)

    keys = iter(jax.random.split(key, 8 + nlayers * 8))
    params = {
        "emb_table": nrm(next(keys), (n_embed_rows, E)),
        "l0_w": nrm(next(keys), (E, d_model)),
        "l0_b": nrm(next(keys), (1, d_model)),
        "l1_w": nrm(next(keys), (d_model, outputs)),
        "l1_b": nrm(next(keys), (1, outputs)),
        "layers": [],
    }
    for _ in range(nlayers):
        lp = {
            "wq": nrm(next(keys), (d_model, d_model)), "bq": jnp.zeros((1, d_model), jnp.float32),
            "wk": nrm(next(keys), (d_model, d_model)), "bk": jnp.zeros((1, d_model), jnp.float32),
            "wv": nrm(next(keys), (d_model, d_model)), "bv": jnp.zeros((1, d_model), jnp.float32),
            "wo": nrm(next(keys), (d_model, d_model)), "bo": jnp.zeros((1, d_model), jnp.float32),
            "g1": jnp.ones((1, d_model), jnp.float32), "beta1": jnp.zeros((1, d_model), jnp.float32),
            "w1": nrm(next(keys), (d_model, d_hid)),   "b1": jnp.zeros((1, d_hid), jnp.float32),
            "w2": nrm(next(keys), (d_hid, d_model)),   "b2": jnp.zeros((1, d_model), jnp.float32),
            "g2": jnp.ones((1, d_model), jnp.float32), "beta2": jnp.zeros((1, d_model), jnp.float32),
        }
        params["layers"].append(lp)
    return params


if __name__ == "__main__":
    # Small shapes consistent with the module
    B, S = 2, 8
    ncodes = 16
    emb_dims = (4, 4)          # embeddings tuple -> E = 16
    E = emb_dims[0] * emb_dims[1]
    d_model, nhead, d_hid = 32, 4, 64
    nlayers = 2
    outputs = 8

    key = jax.random.PRNGKey(0)
    k_par, k_src, k_idx, k_msk = jax.random.split(key, 4)

    params = init_params(k_par, ncodes=ncodes, emb_dims=emb_dims, d_model=d_model,
                         nhead=nhead, d_hid=d_hid, nlayers=nlayers, outputs=outputs)

    src = jax.random.normal(k_src, (B, S, E), jnp.float32)
    idx = jax.random.randint(k_idx, (B, S), 0, ncodes + 1, jnp.int32)
    msk = jax.random.bernoulli(k_msk, 0.8, (B, S))
    msk = msk.at[:, 0].set(True)   # ensure at least one valid key per row

    out = fin2vec_forward(src, idx, msk, params, nhead=nhead)
    out = jax.block_until_ready(out)
    assert out.shape == (B, S, outputs)
    print("KERNEL_OK")
</pallas_src>

<mosaic_0001>
module attributes {stable_mosaic.version = 11 : i64} {
  func.func @_linear_kernel(%arg0: i32, %arg1: memref<16x16xf32, #tpu.memory_space<vmem>>, %arg2: memref<16x128xbf16, #tpu.memory_space<vmem>>, %arg3: memref<1x128xf32, #tpu.memory_space<vmem>>, %arg4: memref<16x128xf32, #tpu.memory_space<vmem>>) attributes {dimension_semantics = [#tpu.dimension_semantics<parallel>], iteration_bounds = array<i64: 1>, scalar_prefetch = 0 : i64, scratch_operands = 0 : i64, tpu.core_type = #tpu.core_type<tc>, window_params = [{transform_indices = @transform_0, window_bounds = array<i64: 16, 16>}, {pipeline_mode = #tpu.pipeline_mode<synchronous>, transform_indices = @transform_1, window_bounds = array<i64: 16, 128>}, {pipeline_mode = #tpu.pipeline_mode<synchronous>, transform_indices = @transform_2, window_bounds = array<i64: 1, 128>}, {transform_indices = @transform_3, window_bounds = array<i64: 16, 128>}]} {
    %c0 = arith.constant 0 : index
    %c0_0 = arith.constant 0 : index
    %0 = vector.load %arg1[%c0, %c0_0] : memref<16x16xf32, #tpu.memory_space<vmem>>, vector<16x16xf32>
    %1 = arith.truncf %0 : vector<16x16xf32> to vector<16x16xbf16>
    %c0_1 = arith.constant 0 : index
    %c0_2 = arith.constant 0 : index
    %2 = vector.load %arg2[%c0_1, %c0_2] : memref<16x128xbf16, #tpu.memory_space<vmem>>, vector<16x128xbf16>
    %cst = arith.constant dense<0.000000e+00> : vector<16x128xf32>
    %3 = tpu.matmul %1, %2, %cst {dimension_numbers = #tpu.dot_dimension_numbers<[1], [0], [0], [1], [0, 0, 1, 1], [], []>} : vector<16x16xbf16>, vector<16x128xbf16>, vector<16x128xf32> -> vector<16x128xf32>
    %c0_3 = arith.constant 0 : index
    %c0_4 = arith.constant 0 : index
    %4 = vector.load %arg3[%c0_3, %c0_4] : memref<1x128xf32, #tpu.memory_space<vmem>>, vector<1x128xf32>
    %5 = vector.broadcast %4 : vector<1x128xf32> to vector<16x128xf32>
    %6 = arith.addf %3, %5 : vector<16x128xf32>
    %cst_5 = arith.constant 0.000000e+00 : f32
    %7 = vector.broadcast %cst_5 : f32 to vector<16x128xf32>
    %8 = arith.maximumf %6, %7 : vector<16x128xf32>
    %c0_6 = arith.constant 0 : index
    %c0_7 = arith.constant 0 : index
    %9 = vector.load %arg4[%c0_6, %c0_7] : memref<16x128xf32, #tpu.memory_space<vmem>>, vector<16x128xf32>
    tpu.vector_store %arg4[%c0_6, %c0_7], %8 {strides = array<i32>} : memref<16x128xf32, #tpu.memory_space<vmem>>, vector<16x128xf32>,
    return
  }
  func.func @transform_0(%arg0: i32) -> (i32, i32) {
    %c0_i32 = arith.constant 0 : i32
    %c0_i32_0 = arith.constant 0 : i32
    return %arg0, %c0_i32 : i32, i32
  }
  func.func @transform_1(%arg0: i32) -> (i32, i32) {
    %c0_i32 = arith.constant 0 : i32
    %c0_i32_0 = arith.constant 0 : i32
    %c0_i32_1 = arith.constant 0 : i32
    return %c0_i32, %c0_i32_0 : i32, i32
  }
  func.func @transform_2(%arg0: i32) -> (i32, i32) {
    %c0_i32 = arith.constant 0 : i32
    %c0_i32_0 = arith.constant 0 : i32
    %c0_i32_1 = arith.constant 0 : i32
    return %c0_i32, %c0_i32_0 : i32, i32
  }
  func.func @transform_3(%arg0: i32) -> (i32, i32) {
    %c0_i32 = arith.constant 0 : i32
    %c0_i32_0 = arith.constant 0 : i32
    return %arg0, %c0_i32 : i32, i32
  }
}

</mosaic_0001>

<llo_original>
// kernel: tpu_custom_call.1
$region0: #{tpu_custom_call.1}
  #allocation0 [shape = 'u32[]', space=smem, size = 0x4, offset = 0x4, fixed_abs, tag = 'smem constant byte address 0x4 - core index']
  #allocation1 [shape = 'u32[144,128]{1,0:T(1,128)}', space=vmem, size = 0x12000, scoped, tag = 'internal scratch']
  %s0 = inlined_call_operand.hbm [shape: f32[16,16], index: 0, kind: input, shape index: {}]
  %s1 = inlined_call_operand.hbm [shape: bf16[16,128], index: 1, kind: input, shape index: {}]
  %s2 = inlined_call_operand.vmem [shape: f32[1,128], index: 2, kind: input, shape index: {}]
  %s3 = inlined_call_operand.hbm [shape: f32[16,128], index: 3, kind: output, shape index: {}]
  %s4 = sld [smem:[#allocation0]]
  $region30: #{tpu_custom_call.1} parent=0
    _
  %s6 = ssub.s32 1, %s4
  %s7 = scalar_select 0, %s6, %s4
  $region1: #{tpu_custom_call.1} parent=0
    #allocation2 [shape = 'u8[8192]{0}', space=vmem, size = 0x2000, scoped, tag = 'input window, operand 0, single buffered']
    #allocation3 [shape = 's32[1]{0}', space=sflag, size = 0x4, scoped, tag = 'scoped memory for tpu_custom_call.1']
    #allocation4 [shape = 's32[1]{0}', space=sflag, size = 0x4, scoped, tag = 'scoped memory for tpu_custom_call.1']
    #allocation5 [shape = 'u8[4096]{0}', space=vmem, size = 0x1000, scoped, tag = 'input window, operand 1, single buffered']
    #allocation6 [shape = 's32[1]{0}', space=sflag, size = 0x4, scoped, tag = 'scoped memory for tpu_custom_call.1']
    #allocation7 [shape = 'u8[8192]{0}', space=vmem, size = 0x2000, scoped, tag = 'output window, operand 0, single buffered']
    %8 = vsyncpa [#allocation3], 0
    %9 = vsyncpa [#allocation6], 0
    %10 = vsyncpa [#allocation4], 0
    // Predicated region
    $region2: #{tpu_custom_call.1} parent=1 // pred_check
      _
    $region3: #{tpu_custom_call.1} parent=1 // pred_check_branch
      %12 = sbr.rel (0) target = $region5
    $region4: #{tpu_custom_call.1} parent=1 // pred_region
      %s14 = ssub.s32 256, 256
      %15 = vsyncadd [#allocation3], %s14
      %s16 = sshll.u32 [#allocation2], 4
      %s17 = int_to_ptr.vmem [resolvable:$true] %s16
      %22 = dma.hbm_to_vmem [thread:$0]  %s0, 256, %s17, [#allocation3], 128, 128, 8
    $region5: #{tpu_custom_call.1} parent=1 // pred_fallthru
      _
    // Predicated region
    $region6: #{tpu_custom_call.1} parent=1 // pred_check
      _
    $region7: #{tpu_custom_call.1} parent=1 // pred_check_branch
      %24 = sbr.rel (0) target = $region9
    $region8: #{tpu_custom_call.1} parent=1 // pred_region
      %s26 = ssub.s32 128, 128
      %27 = vsyncadd [#allocation6], %s26
      %s28 = sshll.u32 [#allocation5], 4
      %s29 = int_to_ptr.vmem [resolvable:$true] %s28
      %34 = dma.hbm_to_vmem [thread:$0]  %s1, 128, %s29, [#allocation6], 64, 64, 4
    $region9: #{tpu_custom_call.1} parent=1 // pred_fallthru
      _
    // Predicated region
    $region10: #{tpu_custom_call.1} parent=1 // pred_check
      _
    $region11: #{tpu_custom_call.1} parent=1 // pred_check_branch
      %36 = sbr.rel (0) target = $region13
    $region12: #{tpu_custom_call.1} parent=1 // pred_region
      _
    $region13: #{tpu_custom_call.1} parent=1 // pred_fallthru
      _
    // Predicated region
    $region14: #{tpu_custom_call.1} parent=1 // pred_check
      _
    $region15: #{tpu_custom_call.1} parent=1 // pred_check_branch
      %38 = sbr.rel (0) target = $region17
    $region16: #{tpu_custom_call.1} parent=1 // pred_region
      %39 = dma.done [#allocation3], 256
    $region17: #{tpu_custom_call.1} parent=1 // pred_fallthru
      _
    // Predicated region
    $region18: #{tpu_custom_call.1} parent=1 // pred_check
      _
    $region19: #{tpu_custom_call.1} parent=1 // pred_check_branch
      %41 = sbr.rel (0) target = $region21
    $region20: #{tpu_custom_call.1} parent=1 // pred_region
      %42 = dma.done [#allocation6], 128
    $region21: #{tpu_custom_call.1} parent=1 // pred_fallthru
      _
    %v44 = vld [vmem:[#allocation2] sm:$0xff]
    %v45 = vld [vmem:[#allocation2 + $0x8] sm:$0xff]
    %v46 = vpack.c.bf16 %v45, %v44
    %v47 = vld [vmem:[#allocation5] sm:$0xf]
    %v48 = vld [vmem:[#allocation5 + $0x4] sm:$0xf]
    %v49 = vld [vmem:[%s2] sm:$0x1]
    %v51 = vlaneseq
    %v52 = vshrl.u32 %v51, 7
    %v53 = vsub.s32 0, %v52
    %v54 = vrot.slane %v49, %v53
    %v58 = vunpack.c.l.b16 %v47
    %v59 = vunpack.c.l.b16 %v48
    %v60 = vpack.c.b16 %v59, %v58
    %vm62 = vcmask 130048
    %v64 = vsel %vm62, %v46, 0
    %66 = vmatprep.subr.bf16.mxu0 0
    %67 = vmatpush1.bf16.msra.mxu0 %v60
    %68 = vmatprep.subr.bf16.mxu0 0
    %69 = vmatpush1.bf16.msra.mxu0 0
    %70 = vmatprep.subr.bf16.mxu0 0
    %71 = vmatpush1.bf16.msra.mxu0 0
    %72 = vmatprep.subr.bf16.mxu0 0
    %73 = vmatpush1.bf16.msra.mxu0 0
    %74 = vmatprep.subr.bf16.mxu0 0
    %75 = vmatpush1.bf16.msra.mxu0 0
    %76 = vmatprep.subr.bf16.mxu0 0
    %77 = vmatpush1.bf16.msra.mxu0 0
    %78 = vmatprep.subr.bf16.mxu0 0
    %79 = vmatpush1.bf16.msra.mxu0 0
    %80 = vmatprep.subr.bf16.mxu0 0
    %81 = vmatpush1.bf16.msra.mxu0 0
    %82 = vmatprep.subr.bf16.mxu0 0
    %83 = vmatpush1.bf16.msra.mxu0 0
    %84 = vmatprep.subr.bf16.mxu0 0
    %85 = vmatpush1.bf16.msra.mxu0 0
    %86 = vmatprep.subr.bf16.mxu0 0
    %87 = vmatpush1.bf16.msra.mxu0 0
    %88 = vmatprep.subr.bf16.mxu0 0
    %89 = vmatpush1.bf16.msra.mxu0 0
    %90 = vmatprep.subr.bf16.mxu0 0
    %91 = vmatpush1.bf16.msra.mxu0 0
    %92 = vmatprep.subr.bf16.mxu0 0
    %93 = vmatpush1.bf16.msra.mxu0 0
    %94 = vmatprep.subr.bf16.mxu0 0
    %95 = vmatpush1.bf16.msra.mxu0 0
    %96 = vmatprep.subr.bf16.mxu0 0
    %97 = vmatpush1.bf16.msra.mxu0 0
    %98 = vmatprep.mubr.bf16.mxu0 0
    %99 = vmatmul.mubr.bf16.gmra.mrb[0].mxu0 %v64
    %v100 = vpop.f32.mrb[0].mxu0
    %v101 = vadd.f32 %v54, %v100
    %v102 = vpop.f32.mrb[0].mxu0
    %v103 = vpop.f32.mrb[0].mxu0
    %v104 = vadd.f32 %v54, %v103
    %v105 = vpop.f32.mrb[0].mxu0
    %106 = vdwg.mxu0
    %v107 = vmax.f32 %v101, 0.0
    %v108 = vmax.f32 %v104, 0.0
    %109 = vst [vmem:[#allocation7] sm:$0xff] %v107
    %110 = vst [vmem:[#allocation7 + $0x8] sm:$0xff] %v108
    // Predicated region
    $region22: #{tpu_custom_call.1} parent=1 // pred_check
      _
    $region23: #{tpu_custom_call.1} parent=1 // pred_check_branch
      %112 = sbr.rel (0) target = $region25
    $region24: #{tpu_custom_call.1} parent=1 // pred_region
      %s114 = ssub.s32 256, 256
      %115 = vsyncadd [#allocation4], %s114
      %s116 = sshll.u32 [#allocation7], 4
      %s117 = int_to_ptr.vmem [resolvable:$true] %s116
      %122 = dma.vmem_to_hbm [thread:$0]  %s117, 256, %s3, [#allocation4], 128, 128, 8
    $region25: #{tpu_custom_call.1} parent=1 // pred_fallthru
      _
    // Predicated region
    $region26: #{tpu_custom_call.1} parent=1 // pred_check
      _
    $region27: #{tpu_custom_call.1} parent=1 // pred_check_branch
      %124 = sbr.rel (0) target = $region29
    $region28: #{tpu_custom_call.1} parent=1 // pred_region
      %125 = dma.done [#allocation4], 256
    $region29: #{tpu_custom_call.1} parent=1 // pred_fallthru
      _
    %126 = vsyncpa [#allocation3], 1
    %127 = vsyncpa [#allocation6], 1
    %128 = vsyncpa [#allocation4], 1

</llo_original>
